<compile_context>
chip_gen: v7x
topology: tpu7x:2x2x1
jax: 0.10.0
libtpu: 0.0.40
codegen_flags: <defaults>
</compile_context>

<pallas_src>
import functools

import numpy as np
import jax
import jax.numpy as jnp
from jax import lax
from jax.experimental import pallas as pl
from jax.experimental.pallas import tpu as pltpu


def _repeated_layers_kernel(iterations, shifts, h_ref, x_ref, p_ref, u_out):
    """One lane-dense batch tile of RepeatedLayersSharedPixel.forward.

    h_ref : (H, TB) initial hidden (raw, may contain -1); hidden on sublanes,
            batch on lanes.
    x_ref : (H, TB) input (D_input == hidden).
    p_ref : (3+NB, H, 1) resident, host-folded parameter columns:
              p[0]   = scalar
              p[1]   = scalar * bias
              p[2]   = scalar * diag(a * inputWeight)
              p[3+k] = scalar * k-th nonzero diagonal band of (w * hiddenWeight),
                       boundary rows already zeroed.
    u_out : (H, TB) final hidden state.
    shifts: static tuple; pltpu.roll(u, shifts[k], 0)[i] == u[i + offset_k] for
            the rows where the band coefficient is nonzero.
    """
    H, TB = h_ref.shape
    nb = len(shifts)

    # Loop-invariant parameter columns, lane-broadcast once (hoisted out of the
    # recurrence -- JAX does not CSE broadcast_in_dim).
    s_b = jnp.broadcast_to(p_ref[0], (H, TB))
    b_b = jnp.broadcast_to(p_ref[1], (H, TB))
    a_b = jnp.broadcast_to(p_ref[2], (H, TB))
    coefs = [jnp.broadcast_to(p_ref[3 + k], (H, TB)) for k in range(nb)]

    h = h_ref[...]
    # u_fix: initial hidden with the -1 entries zeroed, fixed across iterations.
    u_fix = jnp.where(h == -1.0, 0.0, h)
    # Iteration-invariant term with `scalar` folded in:
    #   tanh(s*(u_fix + W@u + b + A@x)) == tanh(fixed + sum_k coef_k * roll_k(u))
    fixed = u_fix * s_b + b_b + x_ref[...] * a_b

    def step(u):
        acc = fixed
        for k in range(nb):
            # 4-neighbor stencil: each band of w*hiddenWeight is a per-row
            # coefficient times a sublane rotation of u (XLU slot, no MXU).
            acc = acc + coefs[k] * pltpu.roll(u, shift=shifts[k], axis=0)
        return jnp.tanh(acc)

    u = h  # first iteration uses the raw initial hidden (incl. -1), like torch
    if iterations <= 8:
        for _ in range(iterations):       # static trip count -> fully unrolled
            u = step(u)
    else:
        u = lax.fori_loop(0, iterations, lambda _, uu: step(uu), u, unroll=4)

    u_out[...] = u  # single dense, unmasked (lane-full) store of the whole tile


def _pick_batch_tile(batch):
    """Lane-dense tile (batch on the 128-wide lane axis).

    Prefer >=2 grid steps so v7x's two TensorCores both get work under
    dimension_semantics=("parallel",); within that, prefer the largest tile
    (>=256 lanes -> >=2 independent lane tiles per step for ILP, fewer ~0.35us
    grid-step overheads on v5e/v6e)."""
    for tb in (512, 256, 128):
        if batch % tb == 0 and batch // tb >= 2:
            return tb
    for tb in (512, 256, 128):
        if batch % tb == 0:
            return tb
    return batch  # small / odd batch: one full block (lane dim == full array dim)


def repeated_layers_shared_pixel(initial_hidden, inp, params, iterations,
                                 *, batch_tile=None):
    """Pallas forward of RepeatedLayersSharedPixel.

    initial_hidden, inp : (batch, hidden) arrays (D_input == hidden).
    params              : dict of concrete (host-readable) parameters.
    Returns (batch, hidden) float32.
    """
    batch, hidden = initial_hidden.shape
    H = hidden

    # ---- host-side parameter folding (weights are frozen buffers) -------------
    w = np.asarray(params["w"], np.float32).reshape(H)
    M = np.asarray(params["hiddenWeight"], np.float32)
    a = np.asarray(params["a"], np.float32).reshape(H)
    iW = np.asarray(params["inputWeight"], np.float32)
    b = np.asarray(params["bias"], np.float32).reshape(H)
    s = float(np.asarray(params["scalar"], np.float32).reshape(()))

    W_eff = w[:, None] * M                      # (H, H), <=4 nonzeros/row (stencil)
    # Decompose W_eff into its nonzero diagonal bands:
    #   (W_eff @ u)[i] = sum_d W_eff[i, i+d] * u[i+d]
    # Boundary rows get coefficient 0, so pltpu.roll's cyclic wrap is harmless.
    offsets, band_coefs = [], []
    for d in range(-(H - 1), H):
        i = np.arange(max(0, -d), min(H, H - d))
        band = np.zeros(H, np.float32)
        band[i] = W_eff[i, i + d]
        if np.any(band != 0.0):
            offsets.append(d)
            band_coefs.append(s * band)         # fold the scalar in
    shifts = tuple(int((-d) % H) for d in offsets)
    nb = len(offsets)
    # TODO(synk): if hiddenWeight were ever dense (many bands), a bf16 MXU dot
    # path would beat the band/stencil path; unnecessary for the pixel adjacency mask.

    a_diag = a * np.diagonal(iW)                # inputWeight is diagonal (diagMask)
    p_host = np.stack([np.full(H, s, np.float32), s * b, s * a_diag]
                      + band_coefs, axis=0)     # (3+nb, H)
    p_arr = jnp.asarray(p_host).reshape(3 + nb, H, 1)

    # ---- lane-dense layout: (hidden, batch), batch on the lane axis -----------
    h_t = jnp.asarray(initial_hidden, jnp.float32).T    # (H, B)
    x_t = jnp.asarray(inp, jnp.float32).T                # (H, B)

    if batch_tile is None:
        batch_tile = _pick_batch_tile(batch)
    assert batch % batch_tile == 0
    assert batch_tile == batch or batch_tile % 128 == 0

    kernel = functools.partial(_repeated_layers_kernel, int(iterations), shifts)

    out_t = pl.pallas_call(
        kernel,
        out_shape=jax.ShapeDtypeStruct((H, batch), jnp.float32),
        grid=(batch // batch_tile,),
        in_specs=[
            pl.BlockSpec((H, batch_tile), lambda i: (0, i)),     # initial hidden
            pl.BlockSpec((H, batch_tile), lambda i: (0, i)),     # input
            pl.BlockSpec((3 + nb, H, 1), lambda i: (0, 0, 0)),   # folded params (resident)
        ],
        out_specs=pl.BlockSpec((H, batch_tile), lambda i: (0, i)),
        compiler_params=pltpu.CompilerParams(
            dimension_semantics=("parallel",)),
        input_output_aliases={0: 0},   # u reuses the transposed-hidden HBM temp
    )(h_t, x_t, p_arr)

    return out_t.T                                        # back to (batch, hidden)


# ----------------------------------------------------------------------------
# Deterministic parameter construction (mirrors the module's __init__) and a
# pure-JAX reference of the torch forward (full matmuls, per-iteration scale).
# ----------------------------------------------------------------------------
def build_masks(side):
    """weightMask: 4-neighbor adjacency of a side x side pixel grid; diagMask: identity."""
    hidden = side * side
    weight_mask = np.zeros((hidden, hidden), dtype=bool)
    for r in range(side):
        for c in range(side):
            i = r * side + c
            for dr, dc in ((-1, 0), (1, 0), (0, -1), (0, 1)):
                rr, cc = r + dr, c + dc
                if 0 <= rr < side and 0 <= cc < side:
                    weight_mask[i, rr * side + cc] = True
    diag_mask = np.eye(hidden, dtype=bool)
    return weight_mask, diag_mask


def build_params(weight_mask, diag_mask, key):
    """Mirrors RepeatedLayersSharedPixel.__init__ (edgeMask/cornerMask are unused there)."""
    hidden = weight_mask.shape[0]
    kw, ka = jax.random.split(key)
    hiddenWeight = weight_mask.astype(np.float32)      # mask -> 1, invertMask -> 0
    inputWeight = diag_mask.astype(np.float32)         # identity (diagMask)
    bias = np.ones((hidden, 1), np.float32)            # torch.ones(hidden, 1)
    scalar = np.float32(2.0)                           # torch.ones(1) * 2
    w = np.asarray(jax.random.normal(kw, (hidden, 1)), np.float32)
    a = np.asarray(jax.random.normal(ka, (hidden, 1)), np.float32)
    return dict(hiddenWeight=hiddenWeight, inputWeight=inputWeight,
                bias=bias, scalar=scalar, w=w, a=a)


def _reference(initial_hidden, inp, params, iterations):
    """Pure-JAX mirror of the torch forward (dense matmuls, per-iteration scale)."""
    hidden = initial_hidden.shape[1]
    W_eff = (jnp.asarray(params["w"], jnp.float32).reshape(hidden, 1)
             * jnp.asarray(params["hiddenWeight"], jnp.float32))
    A_eff = (jnp.asarray(params["a"], jnp.float32).reshape(hidden, 1)
             * jnp.asarray(params["inputWeight"], jnp.float32))
    b = jnp.asarray(params["bias"], jnp.float32).reshape(1, hidden)
    s = jnp.asarray(params["scalar"], jnp.float32)
    u = initial_hidden.astype(jnp.float32)
    u_fix = jnp.where(u == -1.0, 0.0, u)
    ax = inp.astype(jnp.float32) @ A_eff.T
    for _ in range(iterations):
        v = u_fix + u @ W_eff.T + b + ax
        u = jnp.tanh(v * s)
    return u


if __name__ == "__main__":
    side = 4
    hidden = side * side      # D_input == hidden == 16
    batch = 512               # lane-dense: batch sits on the 128-wide lane axis
    layers = 5                # self.iteration

    key = jax.random.PRNGKey(0)
    kp, kh, kx = jax.random.split(key, 3)

    weight_mask, diag_mask = build_masks(side)
    params = build_params(weight_mask, diag_mask, kp)

    vals = jnp.array([-1.0, 0.0, 1.0], jnp.float32)
    initial_hidden = jax.random.choice(kh, vals, (batch, hidden))
    inp = jax.random.uniform(kx, (batch, hidden), dtype=jnp.float32)

    u = repeated_layers_shared_pixel(initial_hidden, inp, params, layers)
    u = jax.block_until_ready(u)

    assert u.shape == (batch, hidden)
    u_ref = _reference(initial_hidden, inp, params, layers)
    np.testing.assert_allclose(np.asarray(u), np.asarray(u_ref),
                               rtol=5e-3, atol=5e-3)
    print("KERNEL_OK")
</pallas_src>

<mosaic_0001>
module attributes {stable_mosaic.version = 11 : i64} {
  func.func @_repeated_layers_kernel(%arg0: i32, %arg1: memref<16x256xf32, #tpu.memory_space<vmem>>, %arg2: memref<16x256xf32, #tpu.memory_space<vmem>>, %arg3: memref<7x16x1xf32, #tpu.memory_space<vmem>>, %arg4: memref<16x256xf32, #tpu.memory_space<vmem>>) attributes {dimension_semantics = [#tpu.dimension_semantics<parallel>], iteration_bounds = array<i64: 2>, scalar_prefetch = 0 : i64, scratch_operands = 0 : i64, tpu.core_type = #tpu.core_type<tc>, window_params = [{transform_indices = @transform_0, window_bounds = array<i64: 16, 256>}, {transform_indices = @transform_1, window_bounds = array<i64: 16, 256>}, {pipeline_mode = #tpu.pipeline_mode<synchronous>, transform_indices = @transform_2, window_bounds = array<i64: 7, 16, 1>}, {transform_indices = @transform_3, window_bounds = array<i64: 16, 256>}]} {
    %c0 = arith.constant 0 : index
    %c0_0 = arith.constant 0 : index
    %c0_1 = arith.constant 0 : index
    %0 = vector.load %arg3[%c0, %c0_0, %c0_1] : memref<7x16x1xf32, #tpu.memory_space<vmem>>, vector<1x16x1xf32>
    %1 = vector.shape_cast %0 : vector<1x16x1xf32> to vector<16x1xf32>
    %2 = vector.shape_cast %1 : vector<16x1xf32> to vector<16x1xf32>
    %3 = vector.broadcast %2 : vector<16x1xf32> to vector<16x256xf32>
    %c1 = arith.constant 1 : index
    %c0_2 = arith.constant 0 : index
    %c0_3 = arith.constant 0 : index
    %4 = vector.load %arg3[%c1, %c0_2, %c0_3] : memref<7x16x1xf32, #tpu.memory_space<vmem>>, vector<1x16x1xf32>
    %5 = vector.shape_cast %4 : vector<1x16x1xf32> to vector<16x1xf32>
    %6 = vector.shape_cast %5 : vector<16x1xf32> to vector<16x1xf32>
    %7 = vector.broadcast %6 : vector<16x1xf32> to vector<16x256xf32>
    %c2 = arith.constant 2 : index
    %c0_4 = arith.constant 0 : index
    %c0_5 = arith.constant 0 : index
    %8 = vector.load %arg3[%c2, %c0_4, %c0_5] : memref<7x16x1xf32, #tpu.memory_space<vmem>>, vector<1x16x1xf32>
    %9 = vector.shape_cast %8 : vector<1x16x1xf32> to vector<16x1xf32>
    %10 = vector.shape_cast %9 : vector<16x1xf32> to vector<16x1xf32>
    %11 = vector.broadcast %10 : vector<16x1xf32> to vector<16x256xf32>
    %c3 = arith.constant 3 : index
    %c0_6 = arith.constant 0 : index
    %c0_7 = arith.constant 0 : index
    %12 = vector.load %arg3[%c3, %c0_6, %c0_7] : memref<7x16x1xf32, #tpu.memory_space<vmem>>, vector<1x16x1xf32>
    %13 = vector.shape_cast %12 : vector<1x16x1xf32> to vector<16x1xf32>
    %14 = vector.shape_cast %13 : vector<16x1xf32> to vector<16x1xf32>
    %15 = vector.broadcast %14 : vector<16x1xf32> to vector<16x256xf32>
    %c4 = arith.constant 4 : index
    %c0_8 = arith.constant 0 : index
    %c0_9 = arith.constant 0 : index
    %16 = vector.load %arg3[%c4, %c0_8, %c0_9] : memref<7x16x1xf32, #tpu.memory_space<vmem>>, vector<1x16x1xf32>
    %17 = vector.shape_cast %16 : vector<1x16x1xf32> to vector<16x1xf32>
    %18 = vector.shape_cast %17 : vector<16x1xf32> to vector<16x1xf32>
    %19 = vector.broadcast %18 : vector<16x1xf32> to vector<16x256xf32>
    %c5 = arith.constant 5 : index
    %c0_10 = arith.constant 0 : index
    %c0_11 = arith.constant 0 : index
    %20 = vector.load %arg3[%c5, %c0_10, %c0_11] : memref<7x16x1xf32, #tpu.memory_space<vmem>>, vector<1x16x1xf32>
    %21 = vector.shape_cast %20 : vector<1x16x1xf32> to vector<16x1xf32>
    %22 = vector.shape_cast %21 : vector<16x1xf32> to vector<16x1xf32>
    %23 = vector.broadcast %22 : vector<16x1xf32> to vector<16x256xf32>
    %c6 = arith.constant 6 : index
    %c0_12 = arith.constant 0 : index
    %c0_13 = arith.constant 0 : index
    %24 = vector.load %arg3[%c6, %c0_12, %c0_13] : memref<7x16x1xf32, #tpu.memory_space<vmem>>, vector<1x16x1xf32>
    %25 = vector.shape_cast %24 : vector<1x16x1xf32> to vector<16x1xf32>
    %26 = vector.shape_cast %25 : vector<16x1xf32> to vector<16x1xf32>
    %27 = vector.broadcast %26 : vector<16x1xf32> to vector<16x256xf32>
    %c0_14 = arith.constant 0 : index
    %c0_15 = arith.constant 0 : index
    %28 = vector.load %arg1[%c0_14, %c0_15] : memref<16x256xf32, #tpu.memory_space<vmem>>, vector<16x256xf32>
    %cst = arith.constant -1.000000e+00 : f32
    %29 = vector.broadcast %cst : f32 to vector<16x256xf32>
    %30 = arith.cmpf oeq, %28, %29 : vector<16x256xf32>
    %cst_16 = arith.constant 0.000000e+00 : f32
    %31 = vector.broadcast %cst_16 : f32 to vector<16x256xf32>
    %32 = arith.select %30, %31, %28 : vector<16x256xi1>, vector<16x256xf32>
    %33 = arith.mulf %32, %3 : vector<16x256xf32>
    %34 = arith.addf %33, %7 : vector<16x256xf32>
    %c0_17 = arith.constant 0 : index
    %c0_18 = arith.constant 0 : index
    %35 = vector.load %arg2[%c0_17, %c0_18] : memref<16x256xf32, #tpu.memory_space<vmem>>, vector<16x256xf32>
    %36 = arith.mulf %35, %11 : vector<16x256xf32>
    %37 = arith.addf %34, %36 : vector<16x256xf32>
    %c4_i32 = arith.constant 4 : i32
    %38 = tpu.dynamic_rotate %28 by %c4_i32 dim 0 : vector<16x256xf32>, i32 -> vector<16x256xf32>
    %39 = arith.mulf %15, %38 : vector<16x256xf32>
    %40 = arith.addf %37, %39 : vector<16x256xf32>
    %c1_i32 = arith.constant 1 : i32
    %41 = tpu.dynamic_rotate %28 by %c1_i32 dim 0 : vector<16x256xf32>, i32 -> vector<16x256xf32>
    %42 = arith.mulf %19, %41 : vector<16x256xf32>
    %43 = arith.addf %40, %42 : vector<16x256xf32>
    %c15_i32 = arith.constant 15 : i32
    %44 = tpu.dynamic_rotate %28 by %c15_i32 dim 0 : vector<16x256xf32>, i32 -> vector<16x256xf32>
    %45 = arith.mulf %23, %44 : vector<16x256xf32>
    %46 = arith.addf %43, %45 : vector<16x256xf32>
    %c12_i32 = arith.constant 12 : i32
    %47 = tpu.dynamic_rotate %28 by %c12_i32 dim 0 : vector<16x256xf32>, i32 -> vector<16x256xf32>
    %48 = arith.mulf %27, %47 : vector<16x256xf32>
    %49 = arith.addf %46, %48 : vector<16x256xf32>
    %50 = math.tanh %49 : vector<16x256xf32>
    %c4_i32_19 = arith.constant 4 : i32
    %51 = tpu.dynamic_rotate %50 by %c4_i32_19 dim 0 : vector<16x256xf32>, i32 -> vector<16x256xf32>
    %52 = arith.mulf %15, %51 : vector<16x256xf32>
    %53 = arith.addf %37, %52 : vector<16x256xf32>
    %c1_i32_20 = arith.constant 1 : i32
    %54 = tpu.dynamic_rotate %50 by %c1_i32_20 dim 0 : vector<16x256xf32>, i32 -> vector<16x256xf32>
    %55 = arith.mulf %19, %54 : vector<16x256xf32>
    %56 = arith.addf %53, %55 : vector<16x256xf32>
    %c15_i32_21 = arith.constant 15 : i32
    %57 = tpu.dynamic_rotate %50 by %c15_i32_21 dim 0 : vector<16x256xf32>, i32 -> vector<16x256xf32>
    %58 = arith.mulf %23, %57 : vector<16x256xf32>
    %59 = arith.addf %56, %58 : vector<16x256xf32>
    %c12_i32_22 = arith.constant 12 : i32
    %60 = tpu.dynamic_rotate %50 by %c12_i32_22 dim 0 : vector<16x256xf32>, i32 -> vector<16x256xf32>
    %61 = arith.mulf %27, %60 : vector<16x256xf32>
    %62 = arith.addf %59, %61 : vector<16x256xf32>
    %63 = math.tanh %62 : vector<16x256xf32>
    %c4_i32_23 = arith.constant 4 : i32
    %64 = tpu.dynamic_rotate %63 by %c4_i32_23 dim 0 : vector<16x256xf32>, i32 -> vector<16x256xf32>
    %65 = arith.mulf %15, %64 : vector<16x256xf32>
    %66 = arith.addf %37, %65 : vector<16x256xf32>
    %c1_i32_24 = arith.constant 1 : i32
    %67 = tpu.dynamic_rotate %63 by %c1_i32_24 dim 0 : vector<16x256xf32>, i32 -> vector<16x256xf32>
    %68 = arith.mulf %19, %67 : vector<16x256xf32>
    %69 = arith.addf %66, %68 : vector<16x256xf32>
    %c15_i32_25 = arith.constant 15 : i32
    %70 = tpu.dynamic_rotate %63 by %c15_i32_25 dim 0 : vector<16x256xf32>, i32 -> vector<16x256xf32>
    %71 = arith.mulf %23, %70 : vector<16x256xf32>
    %72 = arith.addf %69, %71 : vector<16x256xf32>
    %c12_i32_26 = arith.constant 12 : i32
    %73 = tpu.dynamic_rotate %63 by %c12_i32_26 dim 0 : vector<16x256xf32>, i32 -> vector<16x256xf32>
    %74 = arith.mulf %27, %73 : vector<16x256xf32>
    %75 = arith.addf %72, %74 : vector<16x256xf32>
    %76 = math.tanh %75 : vector<16x256xf32>
    %c4_i32_27 = arith.constant 4 : i32
    %77 = tpu.dynamic_rotate %76 by %c4_i32_27 dim 0 : vector<16x256xf32>, i32 -> vector<16x256xf32>
    %78 = arith.mulf %15, %77 : vector<16x256xf32>
    %79 = arith.addf %37, %78 : vector<16x256xf32>
    %c1_i32_28 = arith.constant 1 : i32
    %80 = tpu.dynamic_rotate %76 by %c1_i32_28 dim 0 : vector<16x256xf32>, i32 -> vector<16x256xf32>
    %81 = arith.mulf %19, %80 : vector<16x256xf32>
    %82 = arith.addf %79, %81 : vector<16x256xf32>
    %c15_i32_29 = arith.constant 15 : i32
    %83 = tpu.dynamic_rotate %76 by %c15_i32_29 dim 0 : vector<16x256xf32>, i32 -> vector<16x256xf32>
    %84 = arith.mulf %23, %83 : vector<16x256xf32>
    %85 = arith.addf %82, %84 : vector<16x256xf32>
    %c12_i32_30 = arith.constant 12 : i32
    %86 = tpu.dynamic_rotate %76 by %c12_i32_30 dim 0 : vector<16x256xf32>, i32 -> vector<16x256xf32>
    %87 = arith.mulf %27, %86 : vector<16x256xf32>
    %88 = arith.addf %85, %87 : vector<16x256xf32>
    %89 = math.tanh %88 : vector<16x256xf32>
    %c4_i32_31 = arith.constant 4 : i32
    %90 = tpu.dynamic_rotate %89 by %c4_i32_31 dim 0 : vector<16x256xf32>, i32 -> vector<16x256xf32>
    %91 = arith.mulf %15, %90 : vector<16x256xf32>
    %92 = arith.addf %37, %91 : vector<16x256xf32>
    %c1_i32_32 = arith.constant 1 : i32
    %93 = tpu.dynamic_rotate %89 by %c1_i32_32 dim 0 : vector<16x256xf32>, i32 -> vector<16x256xf32>
    %94 = arith.mulf %19, %93 : vector<16x256xf32>
    %95 = arith.addf %92, %94 : vector<16x256xf32>
    %c15_i32_33 = arith.constant 15 : i32
    %96 = tpu.dynamic_rotate %89 by %c15_i32_33 dim 0 : vector<16x256xf32>, i32 -> vector<16x256xf32>
    %97 = arith.mulf %23, %96 : vector<16x256xf32>
    %98 = arith.addf %95, %97 : vector<16x256xf32>
    %c12_i32_34 = arith.constant 12 : i32
    %99 = tpu.dynamic_rotate %89 by %c12_i32_34 dim 0 : vector<16x256xf32>, i32 -> vector<16x256xf32>
    %100 = arith.mulf %27, %99 : vector<16x256xf32>
    %101 = arith.addf %98, %100 : vector<16x256xf32>
    %102 = math.tanh %101 : vector<16x256xf32>
    %c0_35 = arith.constant 0 : index
    %c0_36 = arith.constant 0 : index
    %103 = vector.load %arg4[%c0_35, %c0_36] : memref<16x256xf32, #tpu.memory_space<vmem>>, vector<16x256xf32>
    tpu.vector_store %arg4[%c0_35, %c0_36], %102 {strides = array<i32>} : memref<16x256xf32, #tpu.memory_space<vmem>>, vector<16x256xf32>,
    return
  }
  func.func @transform_0(%arg0: i32) -> (i32, i32) {
    %c0_i32 = arith.constant 0 : i32
    %c0_i32_0 = arith.constant 0 : i32
    return %c0_i32, %arg0 : i32, i32
  }
  func.func @transform_1(%arg0: i32) -> (i32, i32) {
    %c0_i32 = arith.constant 0 : i32
    %c0_i32_0 = arith.constant 0 : i32
    return %c0_i32, %arg0 : i32, i32
  }
  func.func @transform_2(%arg0: i32) -> (i32, i32, i32) {
    %c0_i32 = arith.constant 0 : i32
    %c0_i32_0 = arith.constant 0 : i32
    %c0_i32_1 = arith.constant 0 : i32
    %c0_i32_2 = arith.constant 0 : i32
    return %c0_i32, %c0_i32_0, %c0_i32_1 : i32, i32, i32
  }
  func.func @transform_3(%arg0: i32) -> (i32, i32) {
    %c0_i32 = arith.constant 0 : i32
    %c0_i32_0 = arith.constant 0 : i32
    return %c0_i32, %arg0 : i32, i32
  }
}

</mosaic_0001>

<llo_original>
// kernel: tpu_custom_call.1
$region0: #{tpu_custom_call.1}
  #allocation0 [shape = 'u32[]', space=smem, size = 0x4, offset = 0x4, fixed_abs, tag = 'smem constant byte address 0x4 - core index']
  #allocation1 [shape = 'u32[144,128]{1,0:T(1,128)}', space=vmem, size = 0x12000, scoped, tag = 'internal scratch']
  %s0 = inlined_call_operand.hbm [shape: f32[16,512], index: 0, kind: input, shape index: {}, may-alias: {0,3}]
  %s1 = inlined_call_operand.vmem [shape: f32[16,512], index: 1, kind: input, shape index: {}]
  %s2 = inlined_call_operand.vmem [shape: f32[7,16,1], index: 2, kind: input, shape index: {}]
  %s3 = inlined_call_operand.hbm [shape: f32[16,512], index: 3, kind: output, shape index: {}, may-alias: {0,3}]
  %s4 = sld [smem:[#allocation0]]
  $region72: #{tpu_custom_call.1} parent=0
    _
  %s6 = ssub.s32 1, %s4
  %s7 = scalar_select 0, %s6, %s4
  $region1: #{tpu_custom_call.1} parent=0
    #allocation2 [shape = 'u8[32768]{0}', space=vmem, size = 0x8000, scoped, tag = 'input window, operand 0']
    #allocation3 [shape = 's32[2]{0}', space=sflag, size = 0x8, scoped, tag = 'scoped memory for tpu_custom_call.1']
    #allocation4 [shape = 's32[2]{0}', space=sflag, size = 0x8, scoped, tag = 'scoped memory for tpu_custom_call.1']
    #allocation5 [shape = 'u8[32768]{0}', space=vmem, size = 0x8000, scoped, tag = 'input window, operand 1']
    #allocation6 [shape = 'u8[32768]{0}', space=vmem, size = 0x8000, scoped, tag = 'output window, operand 0']
    %8 = vsyncpa [#allocation3], 0
    %s9 = scalar_lea.sflag [#allocation3], 1
    %10 = vsyncpa %s9, 0
    %11 = vsyncpa [#allocation4], 0
    %s12 = scalar_lea.sflag [#allocation4], 1
    %13 = vsyncpa %s12, 0
    loop: start=0, step=1, limit=4
    $region2: #{tpu_custom_call.1} parent=1 // loop_pre_header
      _
    $region3: #{tpu_custom_call.1} parent=1 // loop_header
      %s15 = sphi 0, %s19
      %p16 = scmp.ge.s32.totalorder %s15, 4
      %s25 = sphi 0, %s27
      %s28 = sphi 0, %s25
      %s29 = sphi 0, %s28
      %s45 = sphi 0, %s29
      %s51 = sphi 0, %s53
      %s54 = sphi 0, %s51
      %s55 = sphi 0, %s54
      %s71 = sphi 0, %s55
      %s75 = sphi 0, %s75
      %s77 = sphi 0, %s75
      %s78 = sphi 0, %s77
      %s92 = sphi 0, %s78
      %s98 = sphi 0, %s100
      %s101 = sphi 0, %s98
      %s102 = sphi 0, %s101
      %s118 = sphi 0, %s102
    $region4: #{tpu_custom_call.1} parent=1 // loop_header_branch
      %18 = sbr.rel (%p16) target = $region8
    $region5: #{tpu_custom_call.1} parent=1 // loop_body
      %s20 = ssub.s32 %s15, 1
      %s21 = ssub.s32 %s15, 2
      %s22 = sadd.s32 %s15, 1
      %s23 = ssub.s32 %s15, %s22
      %p24 = scmp.eq.s32.totalorder %s23, 0
      %s26 = sadd.s32 %s25, 1
      %s27 = scalar_select %p24, %s25, %s26
      %p30 = pneg %p24
      %p31 = scmp.eq.s32.totalorder %s15, 1
      %p32 = por %p30, %p31
      %p33 = scmp.ne.s32.totalorder %s25, %s28
      %p34 = scmp.eq.s32.totalorder %s15, 0
      %p35 = por %p33, %p34
      %p36 = scmp.ne.s32.totalorder %s25, %s28
      %p37 = scmp.eq.s32.totalorder %s20, 1
      %p38 = por %p36, %p37
      %p39 = scmp.ne.s32.totalorder %s28, %s29
      %p40 = scmp.eq.s32.totalorder %s20, 0
      %p41 = por %p39, %p40
      %p42 = scmp.ne.s32.totalorder %s28, %s29
      %p43 = scmp.eq.s32.totalorder %s21, 1
      %p44 = por %p42, %p43
      %p46 = scmp.ne.s32.totalorder %s29, %s45
      %p47 = scmp.eq.s32.totalorder %s21, 0
      %p48 = por %p46, %p47
      %s49 = ssub.s32 %s15, %s22
      %p50 = scmp.eq.s32.totalorder %s49, 0
      %s52 = sadd.s32 %s51, 1
      %s53 = scalar_select %p50, %s51, %s52
      %p56 = pneg %p50
      %p57 = scmp.eq.s32.totalorder %s15, 1
      %p58 = por %p56, %p57
      %p59 = scmp.ne.s32.totalorder %s51, %s54
      %p60 = scmp.eq.s32.totalorder %s15, 0
      %p61 = por %p59, %p60
      %p62 = scmp.ne.s32.totalorder %s51, %s54
      %p63 = scmp.eq.s32.totalorder %s20, 1
      %p64 = por %p62, %p63
      %p65 = scmp.ne.s32.totalorder %s54, %s55
      %p66 = scmp.eq.s32.totalorder %s20, 0
      %p67 = por %p65, %p66
      %p68 = scmp.ne.s32.totalorder %s54, %s55
      %p69 = scmp.eq.s32.totalorder %s21, 1
      %p70 = por %p68, %p69
      %p72 = scmp.ne.s32.totalorder %s55, %s71
      %p73 = scmp.eq.s32.totalorder %s21, 0
      %p74 = por %p72, %p73
      %s76 = sadd.s32 %s75, 1
      %p79 = scmp.eq.s32.totalorder %s15, 1
      %p80 = scmp.ne.s32.totalorder %s75, %s77
      %p81 = scmp.eq.s32.totalorder %s15, 0
      %p82 = por %p80, %p81
      %p83 = scmp.ne.s32.totalorder %s75, %s77
      %p84 = scmp.eq.s32.totalorder %s20, 1
      %p85 = por %p83, %p84
      %p86 = scmp.ne.s32.totalorder %s77, %s78
      %p87 = scmp.eq.s32.totalorder %s20, 0
      %p88 = por %p86, %p87
      %p89 = scmp.ne.s32.totalorder %s77, %s78
      %p90 = scmp.eq.s32.totalorder %s21, 1
      %p91 = por %p89, %p90
      %p93 = scmp.ne.s32.totalorder %s78, %s92
      %p94 = scmp.eq.s32.totalorder %s21, 0
      %p95 = por %p93, %p94
      %s96 = ssub.s32 %s15, %s22
      %p97 = scmp.eq.s32.totalorder %s96, 0
      %s99 = sadd.s32 %s98, 1
      %s100 = scalar_select %p97, %s98, %s99
      %p103 = pneg %p97
      %p104 = scmp.eq.s32.totalorder %s15, 1
      %p105 = por %p103, %p104
      %p106 = scmp.ne.s32.totalorder %s98, %s101
      %p107 = scmp.eq.s32.totalorder %s15, 0
      %p108 = por %p106, %p107
      %p109 = scmp.ne.s32.totalorder %s98, %s101
      %p110 = scmp.eq.s32.totalorder %s20, 1
      %p111 = por %p109, %p110
      %p112 = scmp.ne.s32.totalorder %s101, %s102
      %p113 = scmp.eq.s32.totalorder %s20, 0
      %p114 = por %p112, %p113
      %p115 = scmp.ne.s32.totalorder %s101, %s102
      %p116 = scmp.eq.s32.totalorder %s21, 1
      %p117 = por %p115, %p116
      %p119 = scmp.ne.s32.totalorder %s102, %s118
      %p120 = scmp.eq.s32.totalorder %s21, 0
      %p121 = por %p119, %p120
      %p122 = scmp.le.s32.totalorder 1, %s15
      %p123 = scmp.lt.s32.totalorder %s15, 3
      %p124 = pnand %p122, %p123
      %p125 = pneg %p124
      // Predicated region
      $region9: #{tpu_custom_call.1} parent=5 // pred_check
        _
      $region10: #{tpu_custom_call.1} parent=5 // pred_check_branch
        %127 = sbr.rel (%p124) target = $region12
      $region11: #{tpu_custom_call.1} parent=5 // pred_region
        %s128 = ssub.s32 %s15, 1
        // Predicated region
        $region13: #{tpu_custom_call.1} parent=11 // pred_check
          %p129 = pneg %p88
        $region14: #{tpu_custom_call.1} parent=11 // pred_check_branch
          %131 = sbr.rel (%p129) target = $region16
        $region15: #{tpu_custom_call.1} parent=11 // pred_region
          _
        $region16: #{tpu_custom_call.1} parent=11 // pred_fallthru
          _
      $region12: #{tpu_custom_call.1} parent=5 // pred_fallthru
        _
      %p132 = scmp.lt.s32.totalorder %s15, 2
      // Predicated region
      $region17: #{tpu_custom_call.1} parent=5 // pred_check
        %p133 = pneg %p132
      $region18: #{tpu_custom_call.1} parent=5 // pred_check_branch
        %135 = sbr.rel (%p133) target = $region20
      $region19: #{tpu_custom_call.1} parent=5 // pred_region
        // Predicated region
        $region21: #{tpu_custom_call.1} parent=19 // pred_check
          %p136 = pneg %p35
        $region22: #{tpu_custom_call.1} parent=19 // pred_check_branch
          %138 = sbr.rel (%p136) target = $region24
        $region23: #{tpu_custom_call.1} parent=19 // pred_region
          %s139 = sand.u32 %s25, 1
          %s140 = scalar_lea.sflag [#allocation3], %s139
          %s141 = sand.u32 %s25, 1
          %s142 = smul.addr %s141, 32
          %s143 = scalar_lea.vmem [#allocation2], %s142
          %s144 = smul.u32 2, %s15
          %s146 = ssub.s32 512, 512
          %147 = vsyncadd %s140, %s146
          %s148 = smul.addr %s144, 128
          %s149 = scalar_lea.hbm %s0, %s148
          %s150 = sshll.u32 %s143, 4
          %s151 = int_to_ptr.vmem [resolvable:$true] %s150
          %156 = dma.hbm_to_vmem [thread:$0]  %s149, 512, %s151, %s140, 512, 256, 16
        $region24: #{tpu_custom_call.1} parent=19 // pred_fallthru
          _
        // Predicated region
        $region25: #{tpu_custom_call.1} parent=19 // pred_check
          %p157 = pneg %p61
        $region26: #{tpu_custom_call.1} parent=19 // pred_check_branch
          %159 = sbr.rel (%p157) target = $region28
        $region27: #{tpu_custom_call.1} parent=19 // pred_region
          %s160 = sand.u32 %s51, 1
          %s161 = sand.u32 %s51, 1
          %s162 = smul.addr %s161, 32
          %s163 = scalar_lea.vmem [#allocation5], %s162
          %s164 = smul.u32 2, %s15
          %s165 = smul.addr %s164, 8
          %s166 = scalar_lea.vmem %s1, %s165
          // Predicated region
          $region29: #{tpu_custom_call.1} parent=27 // pred_check
            _
          $region30: #{tpu_custom_call.1} parent=27 // pred_check_branch
            %168 = sbr.rel (0) target = $region32
          $region31: #{tpu_custom_call.1} parent=27 // pred_region
            // Predicated region
            $region33: #{tpu_custom_call.1} parent=31 // pred_check
              _
            $region34: #{tpu_custom_call.1} parent=31 // pred_check_branch
              %170 = sbr.rel (0) target = $region36
            $region35: #{tpu_custom_call.1} parent=31 // pred_region
              loop: start=0, step=1, limit=1
              $region37: #{tpu_custom_call.1} parent=35 // loop_pre_header
                _
              $region38: #{tpu_custom_call.1} parent=35 // loop_header
                %s172 = sphi 0, %s176
                %p173 = scmp.ge.s32.totalorder %s172, 1
                %s177 = sphi %s166, %s166
                %s178 = sphi %s163, %s163
              $region39: #{tpu_custom_call.1} parent=35 // loop_header_branch
                %175 = sbr.rel (%p173) target = $region43
              $region40: #{tpu_custom_call.1} parent=35 // loop_body
                %v179 = vld [vmem:[%s177] sm:$0xff]
                %180 = vst [vmem:[%s178] sm:$0xff] %v179
                %v181 = vld [vmem:[%s177 + $0x8] sm:$0xff]
                %182 = vst [vmem:[%s178 + $0x8] sm:$0xff] %v181
                %v183 = vld [vmem:[%s177 + $0x20] sm:$0xff]
                %184 = vst [vmem:[%s178 + $0x10] sm:$0xff] %v183
                %v185 = vld [vmem:[%s177 + $0x28] sm:$0xff]
                %186 = vst [vmem:[%s178 + $0x18] sm:$0xff] %v185
              $region41: #{tpu_custom_call.1} parent=35 // loop_footer
                %s176 = sadd.s32 1, %s172
              $region42: #{tpu_custom_call.1} parent=35 // loop_footer_branch
                %171 = sbr.rel target = $region38
              $region43: #{tpu_custom_call.1} parent=35 // loop_exit
                _
            $region36: #{tpu_custom_call.1} parent=31 // pred_fallthru
              _
            // Predicated region
            $region44: #{tpu_custom_call.1} parent=31 // pred_check
              _
            $region45: #{tpu_custom_call.1} parent=31 // pred_check_branch
              %188 = sbr.rel target = $region47
            $region46: #{tpu_custom_call.1} parent=31 // pred_region
              _
            $region47: #{tpu_custom_call.1} parent=31 // pred_fallthru
              _
          $region32: #{tpu_custom_call.1} parent=27 // pred_fallthru
            _
          %189 = vnop
        $region28: #{tpu_custom_call.1} parent=19 // pred_fallthru
          _
      $region20: #{tpu_custom_call.1} parent=5 // pred_fallthru
        _
      %p190 = scmp.le.s32.totalorder 1, %s15
      %p191 = scmp.lt.s32.totalorder %s15, 3
      %p192 = pnand %p190, %p191
      %p193 = pneg %p192
      // Predicated region
      $region48: #{tpu_custom_call.1} parent=5 // pred_check
        _
      $region49: #{tpu_custom_call.1} parent=5 // pred_check_branch
        %195 = sbr.rel (%p192) target = $region51
      $region50: #{tpu_custom_call.1} parent=5 // pred_region
        %s196 = ssub.s32 %s15, 1
        %s197 = sand.u32 %s28, 1
        %s198 = scalar_lea.sflag [#allocation3], %s197
        %s199 = sand.u32 %s28, 1
        %s200 = smul.addr %s199, 32
        %s201 = scalar_lea.vmem [#allocation2], %s200
        // Predicated region
        $region52: #{tpu_custom_call.1} parent=50 // pred_check
          %p202 = pneg %p41
        $region53: #{tpu_custom_call.1} parent=50 // pred_check_branch
          %204 = sbr.rel (%p202) target = $region55
        $region54: #{tpu_custom_call.1} parent=50 // pred_region
          %205 = dma.done %s198, 512
        $region55: #{tpu_custom_call.1} parent=50 // pred_fallthru
          _
        %s206 = sand.u32 %s54, 1
        %s207 = sand.u32 %s54, 1
        %s208 = smul.addr %s207, 32
        %s209 = scalar_lea.vmem [#allocation5], %s208
        // Predicated region
        $region56: #{tpu_custom_call.1} parent=50 // pred_check
          %p210 = pneg %p67
        $region57: #{tpu_custom_call.1} parent=50 // pred_check_branch
          %212 = sbr.rel (%p210) target = $region59
        $region58: #{tpu_custom_call.1} parent=50 // pred_region
          _
        $region59: #{tpu_custom_call.1} parent=50 // pred_fallthru
          _
        %s213 = sand.u32 %s28, 1
        %s214 = scalar_lea.sflag [#allocation3], %s213
        %s215 = sand.u32 %s28, 1
        %s216 = smul.addr %s215, 32
        %s217 = scalar_lea.vmem [#allocation2], %s216
        %p218 = pneg %p41
        %p219 = pneg %p38
        %s220 = sand.u32 %s54, 1
        %s221 = sand.u32 %s54, 1
        %s222 = smul.addr %s221, 32
        %s223 = scalar_lea.vmem [#allocation5], %s222
        %p224 = pneg %p67
        %p225 = pneg %p64
        %p226 = pneg %p88
        %p227 = pneg %p85
        %p228 = pneg %p114
        %p229 = pneg %p111
        %s230 = sand.u32 %s101, 1
        %s231 = scalar_lea.sflag [#allocation4], %s230
        %s232 = sand.u32 %s101, 1
        %s233 = smul.addr %s232, 32
        %s234 = scalar_lea.vmem [#allocation6], %s233
        %s235 = smul.u32 2, %s20
        %s236 = smul.u32 2, %s20
        %s237 = smul.u32 2, %s20
        %v238 = vld [vmem:[%s2] sm:$0xff]
        %v239 = vld [vmem:[%s2 + $0x8] sm:$0xff]
        %241 = vset.pattern.permute.xlu0 0
        %242 = vperm.xlu0 %241, %v238
        %v243 = vpop.permute.xlu0 %242
        %246 = vset.pattern.permute.xlu0 0
        %247 = vperm.xlu0 %246, %v239
        %v248 = vpop.permute.xlu0 %247
        %s250 = scalar_lea.vmem %s2, 16
        %v251 = vld [vmem:[%s250] sm:$0xff]
        %v252 = vld [vmem:[%s250 + $0x8] sm:$0xff]
        %254 = vset.pattern.permute.xlu0 0
        %255 = vperm.xlu0 %254, %v251
        %v256 = vpop.permute.xlu0 %255
        %259 = vset.pattern.permute.xlu0 0
        %260 = vperm.xlu0 %259, %v252
        %v261 = vpop.permute.xlu0 %260
        %s263 = scalar_lea.vmem %s2, 32
        %v264 = vld [vmem:[%s263] sm:$0xff]
        %v265 = vld [vmem:[%s263 + $0x8] sm:$0xff]
        %267 = vset.pattern.permute.xlu0 0
        %268 = vperm.xlu0 %267, %v264
        %v269 = vpop.permute.xlu0 %268
        %272 = vset.pattern.permute.xlu0 0
        %273 = vperm.xlu0 %272, %v265
        %v274 = vpop.permute.xlu0 %273
        %s276 = scalar_lea.vmem %s2, 48
        %v277 = vld [vmem:[%s276] sm:$0xff]
        %v278 = vld [vmem:[%s276 + $0x8] sm:$0xff]
        %280 = vset.pattern.permute.xlu0 0
        %281 = vperm.xlu0 %280, %v277
        %v282 = vpop.permute.xlu0 %281
        %285 = vset.pattern.permute.xlu0 0
        %286 = vperm.xlu0 %285, %v278
        %v287 = vpop.permute.xlu0 %286
        %s289 = scalar_lea.vmem %s2, 64
        %v290 = vld [vmem:[%s289] sm:$0xff]
        %v291 = vld [vmem:[%s289 + $0x8] sm:$0xff]
        %293 = vset.pattern.permute.xlu0 0
        %294 = vperm.xlu0 %293, %v290
        %v295 = vpop.permute.xlu0 %294
        %298 = vset.pattern.permute.xlu0 0
        %299 = vperm.xlu0 %298, %v291
        %v300 = vpop.permute.xlu0 %299
        %s302 = scalar_lea.vmem %s2, 80
        %v303 = vld [vmem:[%s302] sm:$0xff]
        %v304 = vld [vmem:[%s302 + $0x8] sm:$0xff]
        %306 = vset.pattern.permute.xlu0 0
        %307 = vperm.xlu0 %306, %v303
        %v308 = vpop.permute.xlu0 %307
        %311 = vset.pattern.permute.xlu0 0
        %312 = vperm.xlu0 %311, %v304
        %v313 = vpop.permute.xlu0 %312
        %s315 = scalar_lea.vmem %s2, 96
        %v316 = vld [vmem:[%s315] sm:$0xff]
        %v317 = vld [vmem:[%s315 + $0x8] sm:$0xff]
        %319 = vset.pattern.permute.xlu0 0
        %320 = vperm.xlu0 %319, %v316
        %v321 = vpop.permute.xlu0 %320
        %324 = vset.pattern.permute.xlu0 0
        %325 = vperm.xlu0 %324, %v317
        %v326 = vpop.permute.xlu0 %325
        %v328 = vld [vmem:[%s201] sm:$0xff]
        %v329 = vld [vmem:[%s201 + $0x8] sm:$0xff]
        %v330 = vld [vmem:[%s201 + $0x10] sm:$0xff]
        %v331 = vld [vmem:[%s201 + $0x18] sm:$0xff]
        %vm332 = vcmp.eq.f32.partialorder %v328, -1.0
        %vm333 = vcmp.eq.f32.partialorder %v329, -1.0
        %vm334 = vcmp.eq.f32.partialorder %v330, -1.0
        %vm335 = vcmp.eq.f32.partialorder %v331, -1.0
        %v336 = vsel %vm332, 0.0, %v328
        %v337 = vsel %vm333, 0.0, %v329
        %v338 = vsel %vm334, 0.0, %v330
        %v339 = vsel %vm335, 0.0, %v331
        %v340 = vmul.f32 %v336, %v243
        %v341 = vmul.f32 %v337, %v243
        %v342 = vmul.f32 %v338, %v248
        %v343 = vmul.f32 %v339, %v248
        %v344 = vadd.f32 %v340, %v256
        %v345 = vadd.f32 %v341, %v256
        %v346 = vadd.f32 %v342, %v261
        %v347 = vadd.f32 %v343, %v261
        %v348 = vld [vmem:[%s209] sm:$0xff]
        %v349 = vld [vmem:[%s209 + $0x8] sm:$0xff]
        %v350 = vld [vmem:[%s209 + $0x10] sm:$0xff]
        %v351 = vld [vmem:[%s209 + $0x18] sm:$0xff]
        %v352 = vmul.f32 %v348, %v269
        %v353 = vmul.f32 %v349, %v269
        %v354 = vmul.f32 %v350, %v274
        %v355 = vmul.f32 %v351, %v274
        %v356 = vadd.f32 %v344, %v352
        %v357 = vadd.f32 %v345, %v353
        %v358 = vadd.f32 %v346, %v354
        %v359 = vadd.f32 %v347, %v355
        %v360 = vrot.slane %v328, 4
        %v361 = vrot.slane %v329, 4
        %v362 = vrot.slane %v330, 4
        %v363 = vrot.slane %v331, 4
        %v364 = vlaneseq
        %v365 = vshrl.u32 %v364, 7
        %vm366 = vcmp.lt.s32.totalorder %v365, 4
        %v367 = vsel %vm366, %v360, %v362
        %v368 = vsel %vm366, %v361, %v363
        %v369 = vsel %vm366, %v362, %v360
        %v370 = vsel %vm366, %v363, %v361
        %v371 = vmul.f32 %v282, %v369
        %v372 = vmul.f32 %v282, %v370
        %v373 = vmul.f32 %v287, %v367
        %v374 = vmul.f32 %v287, %v368
        %v375 = vadd.f32 %v356, %v371
        %v376 = vadd.f32 %v357, %v372
        %v377 = vadd.f32 %v358, %v373
        %v378 = vadd.f32 %v359, %v374
        %v379 = vrot.slane %v328, 7
        %v380 = vrot.slane %v329, 7
        %v381 = vrot.slane %v330, 7
        %v382 = vrot.slane %v331, 7
        %vm383 = vcmp.lt.s32.totalorder %v365, 1
        %v384 = vsel %vm383, %v379, %v381
        %v385 = vsel %vm383, %v380, %v382
        %v386 = vsel %vm383, %v381, %v379
        %v387 = vsel %vm383, %v382, %v380
        %v388 = vmul.f32 %v295, %v386
        %v389 = vmul.f32 %v295, %v387
        %v390 = vmul.f32 %v300, %v384
        %v391 = vmul.f32 %v300, %v385
        %v392 = vadd.f32 %v375, %v388
        %v393 = vadd.f32 %v376, %v389
        %v394 = vadd.f32 %v377, %v390
        %v395 = vadd.f32 %v378, %v391
        %v396 = vrot.slane %v328, 1
        %v397 = vrot.slane %v329, 1
        %v398 = vrot.slane %v330, 1
        %v399 = vrot.slane %v331, 1
        %vm400 = vcmp.lt.s32.totalorder %v365, 7
        %v401 = vsel %vm400, %v396, %v398
        %v402 = vsel %vm400, %v397, %v399
        %v403 = vsel %vm400, %v398, %v396
        %v404 = vsel %vm400, %v399, %v397
        %v405 = vmul.f32 %v308, %v401
        %v406 = vmul.f32 %v308, %v402
        %v407 = vmul.f32 %v313, %v403
        %v408 = vmul.f32 %v313, %v404
        %v409 = vadd.f32 %v392, %v405
        %v410 = vadd.f32 %v393, %v406
        %v411 = vadd.f32 %v394, %v407
        %v412 = vadd.f32 %v395, %v408
        %v413 = vmul.f32 %v321, %v367
        %v414 = vmul.f32 %v321, %v368
        %v415 = vmul.f32 %v326, %v369
        %v416 = vmul.f32 %v326, %v370
        %v417 = vadd.f32 %v409, %v413
        %v418 = vadd.f32 %v410, %v414
        %v419 = vadd.f32 %v411, %v415
        %v420 = vadd.f32 %v412, %v416
        %v421 = vtanh.pop %v417
        %v422 = vtanh.pop %v418
        %v423 = vtanh.pop %v419
        %v424 = vtanh.pop %v420
        %v425 = vrot.slane %v421, 4
        %v426 = vrot.slane %v422, 4
        %v427 = vrot.slane %v423, 4
        %v428 = vrot.slane %v424, 4
        %v429 = vsel %vm366, %v425, %v427
        %v430 = vsel %vm366, %v426, %v428
        %v431 = vsel %vm366, %v427, %v425
        %v432 = vsel %vm366, %v428, %v426
        %v433 = vmul.f32 %v282, %v431
        %v434 = vmul.f32 %v282, %v432
        %v435 = vmul.f32 %v287, %v429
        %v436 = vmul.f32 %v287, %v430
        %v437 = vadd.f32 %v356, %v433
        %v438 = vadd.f32 %v357, %v434
        %v439 = vadd.f32 %v358, %v435
        %v440 = vadd.f32 %v359, %v436
        %v441 = vrot.slane %v421, 7
        %v442 = vrot.slane %v422, 7
        %v443 = vrot.slane %v423, 7
        %v444 = vrot.slane %v424, 7
        %v445 = vsel %vm383, %v441, %v443
        %v446 = vsel %vm383, %v442, %v444
        %v447 = vsel %vm383, %v443, %v441
        %v448 = vsel %vm383, %v444, %v442
        %v449 = vmul.f32 %v295, %v447
        %v450 = vmul.f32 %v295, %v448
        %v451 = vmul.f32 %v300, %v445
        %v452 = vmul.f32 %v300, %v446
        %v453 = vadd.f32 %v437, %v449
        %v454 = vadd.f32 %v438, %v450
        %v455 = vadd.f32 %v439, %v451
        %v456 = vadd.f32 %v440, %v452
        %v457 = vrot.slane %v421, 1
        %v458 = vrot.slane %v422, 1
        %v459 = vrot.slane %v423, 1
        %v460 = vrot.slane %v424, 1
        %v461 = vsel %vm400, %v457, %v459
        %v462 = vsel %vm400, %v458, %v460
        %v463 = vsel %vm400, %v459, %v457
        %v464 = vsel %vm400, %v460, %v458
        %v465 = vmul.f32 %v308, %v461
        %v466 = vmul.f32 %v308, %v462
        %v467 = vmul.f32 %v313, %v463
        %v468 = vmul.f32 %v313, %v464
        %v469 = vadd.f32 %v453, %v465
        %v470 = vadd.f32 %v454, %v466
        %v471 = vadd.f32 %v455, %v467
        %v472 = vadd.f32 %v456, %v468
        %v473 = vmul.f32 %v321, %v429
        %v474 = vmul.f32 %v321, %v430
        %v475 = vmul.f32 %v326, %v431
        %v476 = vmul.f32 %v326, %v432
        %v477 = vadd.f32 %v469, %v473
        %v478 = vadd.f32 %v470, %v474
        %v479 = vadd.f32 %v471, %v475
        %v480 = vadd.f32 %v472, %v476
        %v481 = vtanh.pop %v477
        %v482 = vtanh.pop %v478
        %v483 = vtanh.pop %v479
        %v484 = vtanh.pop %v480
        %v485 = vrot.slane %v481, 4
        %v486 = vrot.slane %v482, 4
        %v487 = vrot.slane %v483, 4
        %v488 = vrot.slane %v484, 4
        %v489 = vsel %vm366, %v485, %v487
        %v490 = vsel %vm366, %v486, %v488
        %v491 = vsel %vm366, %v487, %v485
        %v492 = vsel %vm366, %v488, %v486
        %v493 = vmul.f32 %v282, %v491
        %v494 = vmul.f32 %v282, %v492
        %v495 = vmul.f32 %v287, %v489
        %v496 = vmul.f32 %v287, %v490
        %v497 = vadd.f32 %v356, %v493
        %v498 = vadd.f32 %v357, %v494
        %v499 = vadd.f32 %v358, %v495
        %v500 = vadd.f32 %v359, %v496
        %v501 = vrot.slane %v481, 7
        %v502 = vrot.slane %v482, 7
        %v503 = vrot.slane %v483, 7
        %v504 = vrot.slane %v484, 7
        %v505 = vsel %vm383, %v501, %v503
        %v506 = vsel %vm383, %v502, %v504
        %v507 = vsel %vm383, %v503, %v501
        %v508 = vsel %vm383, %v504, %v502
        %v509 = vmul.f32 %v295, %v507
        %v510 = vmul.f32 %v295, %v508
        %v511 = vmul.f32 %v300, %v505
        %v512 = vmul.f32 %v300, %v506
        %v513 = vadd.f32 %v497, %v509
        %v514 = vadd.f32 %v498, %v510
        %v515 = vadd.f32 %v499, %v511
        %v516 = vadd.f32 %v500, %v512
        %v517 = vrot.slane %v481, 1
        %v518 = vrot.slane %v482, 1
        %v519 = vrot.slane %v483, 1
        %v520 = vrot.slane %v484, 1
        %v521 = vsel %vm400, %v517, %v519
        %v522 = vsel %vm400, %v518, %v520
        %v523 = vsel %vm400, %v519, %v517
        %v524 = vsel %vm400, %v520, %v518
        %v525 = vmul.f32 %v308, %v521
        %v526 = vmul.f32 %v308, %v522
        %v527 = vmul.f32 %v313, %v523
        %v528 = vmul.f32 %v313, %v524
        %v529 = vadd.f32 %v513, %v525
        %v530 = vadd.f32 %v514, %v526
        %v531 = vadd.f32 %v515, %v527
        %v532 = vadd.f32 %v516, %v528
        %v533 = vmul.f32 %v321, %v489
        %v534 = vmul.f32 %v321, %v490
        %v535 = vmul.f32 %v326, %v491
        %v536 = vmul.f32 %v326, %v492
        %v537 = vadd.f32 %v529, %v533
        %v538 = vadd.f32 %v530, %v534
        %v539 = vadd.f32 %v531, %v535
        %v540 = vadd.f32 %v532, %v536
        %v541 = vtanh.pop %v537
        %v542 = vtanh.pop %v538
        %v543 = vtanh.pop %v539
        %v544 = vtanh.pop %v540
        %v545 = vrot.slane %v541, 4
        %v546 = vrot.slane %v542, 4
        %v547 = vrot.slane %v543, 4
        %v548 = vrot.slane %v544, 4
        %v549 = vsel %vm366, %v545, %v547
        %v550 = vsel %vm366, %v546, %v548
        %v551 = vsel %vm366, %v547, %v545
        %v552 = vsel %vm366, %v548, %v546
        %v553 = vmul.f32 %v282, %v551
        %v554 = vmul.f32 %v282, %v552
        %v555 = vmul.f32 %v287, %v549
        %v556 = vmul.f32 %v287, %v550
        %v557 = vadd.f32 %v356, %v553
        %v558 = vadd.f32 %v357, %v554
        %v559 = vadd.f32 %v358, %v555
        %v560 = vadd.f32 %v359, %v556
        %v561 = vrot.slane %v541, 7
        %v562 = vrot.slane %v542, 7
        %v563 = vrot.slane %v543, 7
        %v564 = vrot.slane %v544, 7
        %v565 = vsel %vm383, %v561, %v563
        %v566 = vsel %vm383, %v562, %v564
        %v567 = vsel %vm383, %v563, %v561
        %v568 = vsel %vm383, %v564, %v562
        %v569 = vmul.f32 %v295, %v567
        %v570 = vmul.f32 %v295, %v568
        %v571 = vmul.f32 %v300, %v565
        %v572 = vmul.f32 %v300, %v566
        %v573 = vadd.f32 %v557, %v569
        %v574 = vadd.f32 %v558, %v570
        %v575 = vadd.f32 %v559, %v571
        %v576 = vadd.f32 %v560, %v572
        %v577 = vrot.slane %v541, 1
        %v578 = vrot.slane %v542, 1
        %v579 = vrot.slane %v543, 1
        %v580 = vrot.slane %v544, 1
        %v581 = vsel %vm400, %v577, %v579
        %v582 = vsel %vm400, %v578, %v580
        %v583 = vsel %vm400, %v579, %v577
        %v584 = vsel %vm400, %v580, %v578
        %v585 = vmul.f32 %v308, %v581
        %v586 = vmul.f32 %v308, %v582
        %v587 = vmul.f32 %v313, %v583
        %v588 = vmul.f32 %v313, %v584
        %v589 = vadd.f32 %v573, %v585
        %v590 = vadd.f32 %v574, %v586
        %v591 = vadd.f32 %v575, %v587
        %v592 = vadd.f32 %v576, %v588
        %v593 = vmul.f32 %v321, %v549
        %v594 = vmul.f32 %v321, %v550
        %v595 = vmul.f32 %v326, %v551
        %v596 = vmul.f32 %v326, %v552
        %v597 = vadd.f32 %v589, %v593
        %v598 = vadd.f32 %v590, %v594
        %v599 = vadd.f32 %v591, %v595
        %v600 = vadd.f32 %v592, %v596
        %v601 = vtanh.pop %v597
        %v602 = vtanh.pop %v598
        %v603 = vtanh.pop %v599
        %v604 = vtanh.pop %v600
        %v605 = vrot.slane %v601, 4
        %v606 = vrot.slane %v602, 4
        %v607 = vrot.slane %v603, 4
        %v608 = vrot.slane %v604, 4
        %v609 = vsel %vm366, %v605, %v607
        %v610 = vsel %vm366, %v606, %v608
        %v611 = vsel %vm366, %v607, %v605
        %v612 = vsel %vm366, %v608, %v606
        %v613 = vmul.f32 %v282, %v611
        %v614 = vmul.f32 %v282, %v612
        %v615 = vmul.f32 %v287, %v609
        %v616 = vmul.f32 %v287, %v610
        %v617 = vadd.f32 %v356, %v613
        %v618 = vadd.f32 %v357, %v614
        %v619 = vadd.f32 %v358, %v615
        %v620 = vadd.f32 %v359, %v616
        %v621 = vrot.slane %v601, 7
        %v622 = vrot.slane %v602, 7
        %v623 = vrot.slane %v603, 7
        %v624 = vrot.slane %v604, 7
        %v625 = vsel %vm383, %v621, %v623
        %v626 = vsel %vm383, %v622, %v624
        %v627 = vsel %vm383, %v623, %v621
        %v628 = vsel %vm383, %v624, %v622
        %v629 = vmul.f32 %v295, %v627
        %v630 = vmul.f32 %v295, %v628
        %v631 = vmul.f32 %v300, %v625
        %v632 = vmul.f32 %v300, %v626
        %v633 = vadd.f32 %v617, %v629
        %v634 = vadd.f32 %v618, %v630
        %v635 = vadd.f32 %v619, %v631
        %v636 = vadd.f32 %v620, %v632
        %v637 = vrot.slane %v601, 1
        %v638 = vrot.slane %v602, 1
        %v639 = vrot.slane %v603, 1
        %v640 = vrot.slane %v604, 1
        %v641 = vsel %vm400, %v637, %v639
        %v642 = vsel %vm400, %v638, %v640
        %v643 = vsel %vm400, %v639, %v637
        %v644 = vsel %vm400, %v640, %v638
        %v645 = vmul.f32 %v308, %v641
        %v646 = vmul.f32 %v308, %v642
        %v647 = vmul.f32 %v313, %v643
        %v648 = vmul.f32 %v313, %v644
        %v649 = vadd.f32 %v633, %v645
        %v650 = vadd.f32 %v634, %v646
        %v651 = vadd.f32 %v635, %v647
        %v652 = vadd.f32 %v636, %v648
        %v653 = vmul.f32 %v321, %v609
        %v654 = vmul.f32 %v321, %v610
        %v655 = vmul.f32 %v326, %v611
        %v656 = vmul.f32 %v326, %v612
        %v657 = vadd.f32 %v649, %v653
        %v658 = vadd.f32 %v650, %v654
        %v659 = vadd.f32 %v651, %v655
        %v660 = vadd.f32 %v652, %v656
        %v661 = vtanh.pop %v657
        %v662 = vtanh.pop %v658
        %v663 = vtanh.pop %v659
        %v664 = vtanh.pop %v660
        %665 = vst [vmem:[%s234] sm:$0xff] %v661
        %666 = vst [vmem:[%s234 + $0x8] sm:$0xff] %v662
        %667 = vst [vmem:[%s234 + $0x10] sm:$0xff] %v663
        %668 = vst [vmem:[%s234 + $0x18] sm:$0xff] %v664
        %s669 = sand.u32 %s101, 1
        %s670 = scalar_lea.sflag [#allocation4], %s669
        %s671 = sand.u32 %s101, 1
        %s672 = smul.addr %s671, 32
        %s673 = scalar_lea.vmem [#allocation6], %s672
        // Predicated region
        $region60: #{tpu_custom_call.1} parent=50 // pred_check
          %p674 = pneg %p111
        $region61: #{tpu_custom_call.1} parent=50 // pred_check_branch
          %676 = sbr.rel (%p674) target = $region63
        $region62: #{tpu_custom_call.1} parent=50 // pred_region
          %s677 = smul.u32 2, %s20
          %s679 = ssub.s32 512, 512
          %680 = vsyncadd %s670, %s679
          %s681 = smul.addr %s677, 128
          %s682 = scalar_lea.hbm %s3, %s681
          %s683 = sshll.u32 %s673, 4
          %s684 = int_to_ptr.vmem [resolvable:$true] %s683
          %689 = dma.vmem_to_hbm [thread:$0]  %s684, 512, %s682, %s670, 256, 512, 16
        $region63: #{tpu_custom_call.1} parent=50 // pred_fallthru
          _
      $region51: #{tpu_custom_call.1} parent=5 // pred_fallthru
        _
      %p690 = scmp.le.s32.totalorder 2, %s15
      // Predicated region
      $region64: #{tpu_custom_call.1} parent=5 // pred_check
        %p691 = pneg %p690
      $region65: #{tpu_custom_call.1} parent=5 // pred_check_branch
        %693 = sbr.rel (%p691) target = $region67
      $region66: #{tpu_custom_call.1} parent=5 // pred_region
        %s694 = ssub.s32 %s15, 2
        // Predicated region
        $region68: #{tpu_custom_call.1} parent=66 // pred_check
          %p695 = pneg %p117
        $region69: #{tpu_custom_call.1} parent=66 // pred_check_branch
          %697 = sbr.rel (%p695) target = $region71
        $region70: #{tpu_custom_call.1} parent=66 // pred_region
          %s698 = sand.u32 %s102, 1
          %s699 = scalar_lea.sflag [#allocation4], %s698
          %s700 = sand.u32 %s102, 1
          %s701 = smul.addr %s700, 32
          %s702 = scalar_lea.vmem [#allocation6], %s701
          %703 = dma.done %s699, 512
        $region71: #{tpu_custom_call.1} parent=66 // pred_fallthru
          _
      $region67: #{tpu_custom_call.1} parent=5 // pred_fallthru
        _
    $region6: #{tpu_custom_call.1} parent=1 // loop_footer
      %s19 = sadd.s32 1, %s15
    $region7: #{tpu_custom_call.1} parent=1 // loop_footer_branch
      %14 = sbr.rel target = $region3
    $region8: #{tpu_custom_call.1} parent=1 // loop_exit
      _
    %704 = vsyncpa [#allocation3], 1
    %s705 = scalar_lea.sflag [#allocation3], 1
    %706 = vsyncpa %s705, 1
    %707 = vsyncpa [#allocation4], 1
    %s708 = scalar_lea.sflag [#allocation4], 1
    %709 = vsyncpa %s708, 1

</llo_original>
